<compile_context>
chip_gen: v7x
topology: tpu7x:2x2x1
jax: 0.10.0
libtpu: 0.0.40
codegen_flags: <defaults>
</compile_context>

<pallas_src>
import functools

import numpy as np

import jax
import jax.numpy as jnp
from jax.experimental import pallas as pl
from jax.experimental.pallas import tpu as pltpu


# ------------------------ static index construction --------------------------

def build_relative_position_index(window_size):
    """Numpy replica of the buffer built in RelativePositionBias.__init__."""
    Wh, Ww = window_size
    num_relative_distance = (2 * Wh - 1) * (2 * Ww - 1) + 3
    coords = np.stack(np.meshgrid(np.arange(Wh), np.arange(Ww), indexing="ij"))
    coords_flatten = coords.reshape(2, -1)                    # (2, Wh*Ww)
    rel = coords_flatten[:, :, None] - coords_flatten[:, None, :]
    rel = rel.transpose(1, 2, 0).copy()                       # (Wh*Ww, Wh*Ww, 2)
    rel[:, :, 0] += Wh - 1
    rel[:, :, 1] += Ww - 1
    rel[:, :, 0] *= 2 * Ww - 1
    rpi = np.zeros((Wh * Ww + 1,) * 2, dtype=np.int32)
    rpi[1:, 1:] = rel.sum(-1)
    rpi[0, 0:] = num_relative_distance - 3
    rpi[0:, 0] = num_relative_distance - 2
    rpi[0, 0] = num_relative_distance - 1
    return rpi, num_relative_distance


# ------------------------------- small helpers --------------------------------

def _round_up(x, m):
    return ((x + m - 1) // m) * m


def _round_down_min(x, m):
    """Round x down to a multiple of m, but not below m."""
    return max(m, (x // m) * m)


def _vmem_budgets():
    """(one-hot working-set budget, scoped VMEM limit) in bytes for this chip."""
    try:
        cap = pltpu.get_tpu_info().vmem_capacity_bytes
    except Exception:
        cap = 64 * 2**20          # conservative (v7x-sized) fallback
    # ~1/10 of physical VMEM for the streamed one-hot chunk; cap scoped VMEM
    # at half of physical so wide lane-dense tiles never hit the 16/32 MiB
    # scoped defaults on v5e/v6e.
    return cap // 10, cap // 2


# ------------------------------- Pallas kernel --------------------------------

def _rel_pos_bias_kernel(idx_ref, table_t_ref, o_ref, acc_ref, *, onehot_dtype):
    # idx_ref:     (1, tn)  int32    -- column tile of the flattened index
    # table_t_ref: (H, tk)  float32  -- R-chunk of the head-major bias table
    # o_ref:       (H, tn)  out dtype
    # acc_ref:     (H, tn)  float32  VMEM accumulator (lives across the R axis)
    k = pl.program_id(1)
    tk = table_t_ref.shape[1]

    @pl.when(k == 0)
    def _():
        acc_ref[...] = jnp.zeros_like(acc_ref)

    # One-hot for this R-chunk, built without a (tk, tn) int32 iota temp:
    # (tk, 1) row ids vs (1, tn) indices, broadcast by the comparison itself.
    row_ids = jax.lax.broadcasted_iota(jnp.int32, (tk, 1), 0) + k * tk
    onehot = (row_ids == idx_ref[...]).astype(onehot_dtype)          # (tk, tn)

    # Gather-as-matmul on the MXU. Table operand stays f32 (exact bias values);
    # the big streamed operand (the one-hot) is narrow.
    acc_ref[...] += jax.lax.dot_general(
        table_t_ref[...], onehot,
        dimension_numbers=(((1,), (0,)), ((), ())),
        preferred_element_type=jnp.float32)

    @pl.when(k == pl.num_programs(1) - 1)
    def _():
        o_ref[...] = acc_ref[...].astype(o_ref.dtype)


# ------------------------------- forward wrapper -------------------------------

def relative_position_bias_forward(
    relative_position_bias_table,
    relative_position_index,
    *,
    window_size,
    num_heads,
    training_window_size=None,
    out_dtype=jnp.float32,
    r_tile=1024,
):
    """Pallas-backed RelativePositionBias.forward (equal-window branch).

    Returns the (num_heads, Wh*Ww+1, Wh*Ww+1) bias, matching the torch module.
    """
    if training_window_size is None:
        training_window_size = window_size
    if tuple(training_window_size) != tuple(window_size):
        # TODO(synk): bicubic table-resize branch not implemented (no Pallas hot path).
        raise NotImplementedError(
            "training_window_size != window_size branch is not implemented")

    N = window_size[0] * window_size[1] + 1
    NN = N * N
    R, H = relative_position_bias_table.shape
    assert H == num_heads

    # Flat int32 index row and head-major f32 table (one tiny transpose, once).
    idx = relative_position_index.reshape(1, NN).astype(jnp.int32)
    table_t = jnp.transpose(relative_position_bias_table).astype(jnp.float32)

    # --- R axis: chunk + zero-pad so every R block is full.  tk must be a
    # multiple of 128 unless it covers the whole table; zero padding keeps
    # partial chunks free of garbage (padded rows never match any index).
    if R <= r_tile:
        tk, r_pad = R, R
    else:
        tk = _round_up(r_tile, 128)
        r_pad = _round_up(R, tk)
        table_t = jnp.pad(table_t, ((0, 0), (0, r_pad - R)))
    nk = r_pad // tk

    # --- column (N*N) axis: lane-dense tiles sized from the VMEM budget, and
    # at least two tiles whenever NN > 128 so the "parallel" axis can feed
    # both TensorCores on v7x.
    out_bytes = jnp.dtype(out_dtype).itemsize
    onehot_bytes = 2                                   # bf16 one-hot
    budget, vmem_limit = _vmem_budgets()
    # Conservative per-column VMEM: one-hot (+ possible f32 widening of it),
    # f32 accumulator, double-buffered idx/out tiles.
    per_col = tk * (onehot_bytes + 4) + H * 4 + 2 * H * out_bytes + 8
    tn_budget = _round_down_min(budget // per_col, 128)
    if NN <= 128:
        tn = NN
    else:
        tn = min(tn_budget, _round_up(pl.cdiv(NN, 2), 128))
    nj = pl.cdiv(NN, tn)

    cost = pl.CostEstimate(
        flops=2 * H * r_pad * NN,
        transcendentals=0,
        bytes_accessed=4 * H * r_pad + 4 * NN + out_bytes * H * NN)

    def build_call(onehot_dtype):
        kernel = functools.partial(_rel_pos_bias_kernel, onehot_dtype=onehot_dtype)
        return pl.pallas_call(
            kernel,
            out_shape=jax.ShapeDtypeStruct((H, NN), out_dtype),
            grid=(nj, nk),
            in_specs=[
                pl.BlockSpec((1, tn), lambda j, k: (0, j)),    # index column tile
                pl.BlockSpec((H, tk), lambda j, k: (0, k)),    # table R-chunk
            ],
            out_specs=pl.BlockSpec((H, tn), lambda j, k: (0, j)),
            scratch_shapes=[pltpu.VMEM((H, tn), jnp.float32)],
            compiler_params=pltpu.CompilerParams(
                dimension_semantics=("parallel", "arbitrary"),
                vmem_limit_bytes=int(vmem_limit)),
            cost_estimate=cost,
        )

    # bf16 one-hot halves the dominant vst/stream bytes; the f32 table keeps
    # the gathered values exact.  Mixed-dtype (f32 x bf16) matmul support can
    # vary across jax/Mosaic versions, so degrade gracefully to an f32 one-hot.
    try:
        out = build_call(jnp.bfloat16)(idx, table_t)
    except Exception:
        out = build_call(jnp.float32)(idx, table_t)

    # Layout-only reshape to the module's (H, N, N) output.
    return out.reshape(H, N, N)


# --------------------------- pure-JAX reference -------------------------------

def relative_position_bias_reference(table, rel_pos_index, *, num_heads):
    Np1 = rel_pos_index.shape[0]
    bias = table[rel_pos_index.reshape(-1)]                   # (N*N, H)
    return bias.reshape(Np1, Np1, num_heads).transpose(2, 0, 1)


# ----------------------------------- main --------------------------------------

def _run_case(window_size, num_heads, key, r_tile=1024):
    rpi_np, num_rel_dist = build_relative_position_index(window_size)
    # Parameter is zero-init in torch; use random values for a meaningful check.
    table = 0.02 * jax.random.normal(key, (num_rel_dist, num_heads), jnp.float32)
    rpi = jnp.asarray(rpi_np, dtype=jnp.int32)

    out = relative_position_bias_forward(
        table, rpi,
        window_size=window_size, num_heads=num_heads,
        training_window_size=window_size, r_tile=r_tile)
    out = jax.block_until_ready(out)

    N = window_size[0] * window_size[1] + 1
    assert out.shape == (num_heads, N, N)
    ref = relative_position_bias_reference(table, rpi, num_heads=num_heads)
    np.testing.assert_allclose(np.asarray(out), np.asarray(ref),
                               rtol=1e-5, atol=1e-6)


if __name__ == "__main__":
    key = jax.random.PRNGKey(0)

    # Canonical small config (window 4x4 -> N=17, R=52): single R-chunk, two
    # column tiles (NN=289 -> 256 + partial 33) exercising partial-tile handling.
    _run_case((4, 4), num_heads=8, key=jax.random.fold_in(key, 0))

    # Window 7x7 (N=50, R=172) with r_tile=128: exercises the "arbitrary"
    # R-accumulation axis (2 chunks + zero-padded table), num_heads not a
    # multiple of 8, and a partial last column tile (NN=2500 -> 1280 + 1220).
    _run_case((7, 7), num_heads=12, key=jax.random.fold_in(key, 1), r_tile=128)

    print("KERNEL_OK")
</pallas_src>

<mosaic_0001>
module attributes {stable_mosaic.version = 11 : i64} {
  func.func @_rel_pos_bias_kernel(%arg0: i32, %arg1: i32, %arg2: memref<1x256xi32, #tpu.memory_space<vmem>>, %arg3: memref<8x52xf32, #tpu.memory_space<vmem>>, %arg4: memref<8x256xf32, #tpu.memory_space<vmem>>, %arg5: memref<8x256xf32, #tpu.memory_space<vmem>>) attributes {dimension_semantics = [#tpu.dimension_semantics<parallel>, #tpu.dimension_semantics<arbitrary>], iteration_bounds = array<i64: 2, 1>, scalar_prefetch = 0 : i64, scratch_operands = 1 : i64, tpu.core_type = #tpu.core_type<tc>, window_params = [{transform_indices = @transform_0, window_bounds = array<i64: 1, 256>}, {transform_indices = @transform_1, window_bounds = array<i64: 8, 52>}, {transform_indices = @transform_2, window_bounds = array<i64: 8, 256>}]} {
    %c0_i32 = arith.constant 0 : i32
    %0 = arith.cmpi eq, %arg1, %c0_i32 : i32
    %1 = arith.extui %0 : i1 to i32
    %c0_i32_0 = arith.constant 0 : i32
    %2 = arith.cmpi ne, %1, %c0_i32_0 : i32
    scf.if %2 {
      %cst_10 = arith.constant 0.000000e+00 : f32
      %22 = vector.broadcast %cst_10 : f32 to vector<8x256xf32>
      %c0_11 = arith.constant 0 : index
      %c0_12 = arith.constant 0 : index
      %23 = vector.load %arg5[%c0_11, %c0_12] : memref<8x256xf32, #tpu.memory_space<vmem>>, vector<8x256xf32>
      tpu.vector_store %arg5[%c0_11, %c0_12], %22 {strides = array<i32>} : memref<8x256xf32, #tpu.memory_space<vmem>>, vector<8x256xf32>,
    } else {
    }
    %3 = tpu.iota {dimensions = array<i32: 0>} : vector<52x1xi32>
    %c52_i32 = arith.constant 52 : i32
    %4 = arith.muli %arg1, %c52_i32 : i32
    %5 = vector.broadcast %4 : i32 to vector<52x1xi32>
    %6 = arith.addi %3, %5 : vector<52x1xi32>
    %c0 = arith.constant 0 : index
    %c0_1 = arith.constant 0 : index
    %7 = vector.load %arg2[%c0, %c0_1] : memref<1x256xi32, #tpu.memory_space<vmem>>, vector<1x256xi32>
    %8 = vector.broadcast %6 : vector<52x1xi32> to vector<52x256xi32>
    %9 = vector.broadcast %7 : vector<1x256xi32> to vector<52x256xi32>
    %10 = arith.cmpi eq, %8, %9 : vector<52x256xi32>
    %11 = arith.extui %10 : vector<52x256xi1> to vector<52x256xi32>
    %12 = arith.sitofp %11 : vector<52x256xi32> to vector<52x256xf32>
    %13 = arith.truncf %12 : vector<52x256xf32> to vector<52x256xbf16>
    %c0_2 = arith.constant 0 : index
    %c0_3 = arith.constant 0 : index
    %14 = vector.load %arg5[%c0_2, %c0_3] : memref<8x256xf32, #tpu.memory_space<vmem>>, vector<8x256xf32>
    %c0_4 = arith.constant 0 : index
    %c0_5 = arith.constant 0 : index
    %15 = vector.load %arg3[%c0_4, %c0_5] : memref<8x52xf32, #tpu.memory_space<vmem>>, vector<8x52xf32>
    %cst = arith.constant dense<0.000000e+00> : vector<8x256xf32>
    %16 = tpu.matmul %15, %13, %cst {dimension_numbers = #tpu.dot_dimension_numbers<[1], [0], [0], [1], [0, 0, 1, 1], [], []>} : vector<8x52xf32>, vector<52x256xbf16>, vector<8x256xf32> -> vector<8x256xf32>
    %17 = arith.addf %14, %16 : vector<8x256xf32>
    %c0_6 = arith.constant 0 : index
    %c0_7 = arith.constant 0 : index
    %18 = vector.load %arg5[%c0_6, %c0_7] : memref<8x256xf32, #tpu.memory_space<vmem>>, vector<8x256xf32>
    tpu.vector_store %arg5[%c0_6, %c0_7], %17 {strides = array<i32>} : memref<8x256xf32, #tpu.memory_space<vmem>>, vector<8x256xf32>,
    %c0_i32_8 = arith.constant 0 : i32
    %19 = arith.cmpi eq, %arg1, %c0_i32_8 : i32
    %20 = arith.extui %19 : i1 to i32
    %c0_i32_9 = arith.constant 0 : i32
    %21 = arith.cmpi ne, %20, %c0_i32_9 : i32
    scf.if %21 {
      %c0_10 = arith.constant 0 : index
      %c0_11 = arith.constant 0 : index
      %22 = vector.load %arg5[%c0_10, %c0_11] : memref<8x256xf32, #tpu.memory_space<vmem>>, vector<8x256xf32>
      %c0_12 = arith.constant 0 : index
      %c0_13 = arith.constant 0 : index
      %23 = vector.load %arg4[%c0_12, %c0_13] : memref<8x256xf32, #tpu.memory_space<vmem>>, vector<8x256xf32>
      tpu.vector_store %arg4[%c0_12, %c0_13], %22 {strides = array<i32>} : memref<8x256xf32, #tpu.memory_space<vmem>>, vector<8x256xf32>,
    } else {
    }
    return
  }
  func.func @transform_0(%arg0: i32, %arg1: i32) -> (i32, i32) {
    %c0_i32 = arith.constant 0 : i32
    %c0_i32_0 = arith.constant 0 : i32
    return %c0_i32, %arg0 : i32, i32
  }
  func.func @transform_1(%arg0: i32, %arg1: i32) -> (i32, i32) {
    %c0_i32 = arith.constant 0 : i32
    %c0_i32_0 = arith.constant 0 : i32
    return %c0_i32, %arg1 : i32, i32
  }
  func.func @transform_2(%arg0: i32, %arg1: i32) -> (i32, i32) {
    %c0_i32 = arith.constant 0 : i32
    %c0_i32_0 = arith.constant 0 : i32
    return %c0_i32, %arg0 : i32, i32
  }
}

module attributes {stable_mosaic.version = 11 : i64} {
  func.func @_rel_pos_bias_kernel(%arg0: i32, %arg1: i32, %arg2: memref<1x256xi32, #tpu.memory_space<vmem>>, %arg3: memref<8x52xf32, #tpu.memory_space<vmem>>, %arg4: memref<8x256xf32, #tpu.memory_space<vmem>>, %arg5: memref<8x256xf32, #tpu.memory_space<vmem>>) attributes {dimension_semantics = [#tpu.dimension_semantics<parallel>, #tpu.dimension_semantics<arbitrary>], iteration_bounds = array<i64: 2, 1>, scalar_prefetch = 0 : i64, scratch_operands = 1 : i64, tpu.core_type = #tpu.core_type<tc>, window_params = [{transform_indices = @transform_0, window_bounds = array<i64: 1, 256>}, {transform_indices = @transform_1, window_bounds = array<i64: 8, 52>}, {transform_indices = @transform_2, window_bounds = array<i64: 8, 256>}]} {
    %c0_i32 = arith.constant 0 : i32
    %0 = arith.cmpi eq, %arg1, %c0_i32 : i32
    %1 = arith.extui %0 : i1 to i32
    %c0_i32_0 = arith.constant 0 : i32
    %2 = arith.cmpi ne, %1, %c0_i32_0 : i32
    scf.if %2 {
      %cst_10 = arith.constant 0.000000e+00 : f32
      %21 = vector.broadcast %cst_10 : f32 to vector<8x256xf32>
      %c0_11 = arith.constant 0 : index
      %c0_12 = arith.constant 0 : index
      %22 = vector.load %arg5[%c0_11, %c0_12] : memref<8x256xf32, #tpu.memory_space<vmem>>, vector<8x256xf32>
      tpu.vector_store %arg5[%c0_11, %c0_12], %21 {strides = array<i32>} : memref<8x256xf32, #tpu.memory_space<vmem>>, vector<8x256xf32>,
    } else {
    }
    %3 = tpu.iota {dimensions = array<i32: 0>} : vector<52x1xi32>
    %c52_i32 = arith.constant 52 : i32
    %4 = arith.muli %arg1, %c52_i32 : i32
    %5 = vector.broadcast %4 : i32 to vector<52x1xi32>
    %6 = arith.addi %3, %5 : vector<52x1xi32>
    %c0 = arith.constant 0 : index
    %c0_1 = arith.constant 0 : index
    %7 = vector.load %arg2[%c0, %c0_1] : memref<1x256xi32, #tpu.memory_space<vmem>>, vector<1x256xi32>
    %8 = vector.broadcast %6 : vector<52x1xi32> to vector<52x256xi32>
    %9 = vector.broadcast %7 : vector<1x256xi32> to vector<52x256xi32>
    %10 = arith.cmpi eq, %8, %9 : vector<52x256xi32>
    %11 = arith.extui %10 : vector<52x256xi1> to vector<52x256xi32>
    %12 = arith.sitofp %11 : vector<52x256xi32> to vector<52x256xf32>
    %c0_2 = arith.constant 0 : index
    %c0_3 = arith.constant 0 : index
    %13 = vector.load %arg5[%c0_2, %c0_3] : memref<8x256xf32, #tpu.memory_space<vmem>>, vector<8x256xf32>
    %c0_4 = arith.constant 0 : index
    %c0_5 = arith.constant 0 : index
    %14 = vector.load %arg3[%c0_4, %c0_5] : memref<8x52xf32, #tpu.memory_space<vmem>>, vector<8x52xf32>
    %cst = arith.constant dense<0.000000e+00> : vector<8x256xf32>
    %15 = tpu.matmul %14, %12, %cst {dimension_numbers = #tpu.dot_dimension_numbers<[1], [0], [0], [1], [0, 0, 1, 1], [], []>} : vector<8x52xf32>, vector<52x256xf32>, vector<8x256xf32> -> vector<8x256xf32>
    %16 = arith.addf %13, %15 : vector<8x256xf32>
    %c0_6 = arith.constant 0 : index
    %c0_7 = arith.constant 0 : index
    %17 = vector.load %arg5[%c0_6, %c0_7] : memref<8x256xf32, #tpu.memory_space<vmem>>, vector<8x256xf32>
    tpu.vector_store %arg5[%c0_6, %c0_7], %16 {strides = array<i32>} : memref<8x256xf32, #tpu.memory_space<vmem>>, vector<8x256xf32>,
    %c0_i32_8 = arith.constant 0 : i32
    %18 = arith.cmpi eq, %arg1, %c0_i32_8 : i32
    %19 = arith.extui %18 : i1 to i32
    %c0_i32_9 = arith.constant 0 : i32
    %20 = arith.cmpi ne, %19, %c0_i32_9 : i32
    scf.if %20 {
      %c0_10 = arith.constant 0 : index
      %c0_11 = arith.constant 0 : index
      %21 = vector.load %arg5[%c0_10, %c0_11] : memref<8x256xf32, #tpu.memory_space<vmem>>, vector<8x256xf32>
      %c0_12 = arith.constant 0 : index
      %c0_13 = arith.constant 0 : index
      %22 = vector.load %arg4[%c0_12, %c0_13] : memref<8x256xf32, #tpu.memory_space<vmem>>, vector<8x256xf32>
      tpu.vector_store %arg4[%c0_12, %c0_13], %21 {strides = array<i32>} : memref<8x256xf32, #tpu.memory_space<vmem>>, vector<8x256xf32>,
    } else {
    }
    return
  }
  func.func @transform_0(%arg0: i32, %arg1: i32) -> (i32, i32) {
    %c0_i32 = arith.constant 0 : i32
    %c0_i32_0 = arith.constant 0 : i32
    return %c0_i32, %arg0 : i32, i32
  }
  func.func @transform_1(%arg0: i32, %arg1: i32) -> (i32, i32) {
    %c0_i32 = arith.constant 0 : i32
    %c0_i32_0 = arith.constant 0 : i32
    return %c0_i32, %arg1 : i32, i32
  }
  func.func @transform_2(%arg0: i32, %arg1: i32) -> (i32, i32) {
    %c0_i32 = arith.constant 0 : i32
    %c0_i32_0 = arith.constant 0 : i32
    return %c0_i32, %arg0 : i32, i32
  }
}

</mosaic_0001>

<llo_original>
// kernel: tpu_custom_call.1
$region0: #{tpu_custom_call.1}
  #allocation0 [shape = 'u32[]', space=smem, size = 0x4, offset = 0x4, fixed_abs, tag = 'smem constant byte address 0x4 - core index']
  #allocation1 [shape = 'u32[144,128]{1,0:T(1,128)}', space=vmem, size = 0x12000, scoped, tag = 'internal scratch']
  #allocation2 [shape = 'f32[8,256]{1,0:T(8,128)}', space=vmem, size = 0x2000, scoped, tag = 'scratch operand']
  %s0 = inlined_call_operand.hbm [shape: s32[1,289], index: 0, kind: input, shape index: {}]
  %s1 = inlined_call_operand.hbm [shape: f32[8,52], index: 1, kind: input, shape index: {}]
  %s2 = inlined_call_operand.hbm [shape: f32[8,289], index: 2, kind: output, shape index: {}]
  %s3 = sld [smem:[#allocation0]]
  $region57: #{tpu_custom_call.1} parent=0
    _
  %s5 = ssub.s32 1, %s3
  %s6 = scalar_select 0, %s5, %s3
  $region1: #{tpu_custom_call.1} parent=0
    #allocation3 [shape = 'u8[2048]{0}', space=vmem, size = 0x800, scoped, tag = 'input window, operand 0']
    #allocation4 [shape = 's32[2]{0}', space=sflag, size = 0x8, scoped, tag = 'scoped memory for tpu_custom_call.1']
    #allocation5 [shape = 's32[2]{0}', space=sflag, size = 0x8, scoped, tag = 'scoped memory for tpu_custom_call.1']
    #allocation6 [shape = 'u8[4096]{0}', space=vmem, size = 0x1000, scoped, tag = 'input window, operand 1, single buffered']
    #allocation7 [shape = 's32[1]{0}', space=sflag, size = 0x4, scoped, tag = 'scoped memory for tpu_custom_call.1']
    #allocation8 [shape = 'u8[16384]{0}', space=vmem, size = 0x4000, scoped, tag = 'output window, operand 0']
    %7 = vsyncpa [#allocation4], 0
    %s8 = scalar_lea.sflag [#allocation4], 1
    %9 = vsyncpa %s8, 0
    %10 = vsyncpa [#allocation7], 0
    %11 = vsyncpa [#allocation5], 0
    %s12 = scalar_lea.sflag [#allocation5], 1
    %13 = vsyncpa %s12, 0
    loop: start=0, step=1, limit=4
    $region2: #{tpu_custom_call.1} parent=1 // loop_pre_header
      _
    $region3: #{tpu_custom_call.1} parent=1 // loop_header
      %s15 = sphi 0, %s19
      %p16 = scmp.ge.s32.totalorder %s15, 4
      %s22 = sphi 0, %s34
      %s23 = sphi 0, %s30
      %s24 = sphi 0, %s22
      %s25 = sphi 0, %s23
      %s26 = sphi 0, %s24
      %s27 = sphi 0, %s25
      %s37 = sphi 0, %s39
      %s40 = sphi 0, %s37
      %s41 = sphi 0, %s40
      %s57 = sphi 0, %s41
      %s63 = sphi 0, %s65
      %s66 = sphi 0, %s63
      %s67 = sphi 0, %s66
      %s83 = sphi 0, %s67
      %s89 = sphi 0, %s91
      %s92 = sphi 0, %s89
      %s93 = sphi 0, %s92
      %s109 = sphi 0, %s93
    $region4: #{tpu_custom_call.1} parent=1 // loop_header_branch
      %18 = sbr.rel (%p16) target = $region8
    $region5: #{tpu_custom_call.1} parent=1 // loop_body
      %s20 = ssub.s32 %s15, 1
      %s21 = ssub.s32 %s15, 2
      %s28 = sadd.s32 1, %s23
      %p29 = scmp.ge.s32.totalorder %s28, 1
      %s30 = scalar_select %p29, 0, %s28
      %s31 = sadd.s32 1, %s22
      %s32 = scalar_select %p29, %s31, %s22
      %p33 = scmp.ge.s32.totalorder %s32, 2
      %s34 = scalar_select %p33, 0, %s32
      %s35 = ssub.s32 %s22, %s34
      %p36 = scmp.eq.s32.totalorder %s35, 0
      %s38 = sadd.s32 %s37, 1
      %s39 = scalar_select %p36, %s37, %s38
      %p42 = pneg %p36
      %p43 = scmp.eq.s32.totalorder %s15, 1
      %p44 = por %p42, %p43
      %p45 = scmp.ne.s32.totalorder %s37, %s40
      %p46 = scmp.eq.s32.totalorder %s15, 0
      %p47 = por %p45, %p46
      %p48 = scmp.ne.s32.totalorder %s37, %s40
      %p49 = scmp.eq.s32.totalorder %s20, 1
      %p50 = por %p48, %p49
      %p51 = scmp.ne.s32.totalorder %s40, %s41
      %p52 = scmp.eq.s32.totalorder %s20, 0
      %p53 = por %p51, %p52
      %p54 = scmp.ne.s32.totalorder %s40, %s41
      %p55 = scmp.eq.s32.totalorder %s21, 1
      %p56 = por %p54, %p55
      %p58 = scmp.ne.s32.totalorder %s41, %s57
      %p59 = scmp.eq.s32.totalorder %s21, 0
      %p60 = por %p58, %p59
      %s61 = ssub.s32 %s23, %s30
      %p62 = scmp.eq.s32.totalorder %s61, 0
      %s64 = sadd.s32 %s63, 1
      %s65 = scalar_select %p62, %s63, %s64
      %p68 = pneg %p62
      %p69 = scmp.eq.s32.totalorder %s15, 1
      %p70 = por %p68, %p69
      %p71 = scmp.ne.s32.totalorder %s63, %s66
      %p72 = scmp.eq.s32.totalorder %s15, 0
      %p73 = por %p71, %p72
      %p74 = scmp.ne.s32.totalorder %s63, %s66
      %p75 = scmp.eq.s32.totalorder %s20, 1
      %p76 = por %p74, %p75
      %p77 = scmp.ne.s32.totalorder %s66, %s67
      %p78 = scmp.eq.s32.totalorder %s20, 0
      %p79 = por %p77, %p78
      %p80 = scmp.ne.s32.totalorder %s66, %s67
      %p81 = scmp.eq.s32.totalorder %s21, 1
      %p82 = por %p80, %p81
      %p84 = scmp.ne.s32.totalorder %s67, %s83
      %p85 = scmp.eq.s32.totalorder %s21, 0
      %p86 = por %p84, %p85
      %s87 = ssub.s32 %s22, %s34
      %p88 = scmp.eq.s32.totalorder %s87, 0
      %s90 = sadd.s32 %s89, 1
      %s91 = scalar_select %p88, %s89, %s90
      %p94 = pneg %p88
      %p95 = scmp.eq.s32.totalorder %s15, 1
      %p96 = por %p94, %p95
      %p97 = scmp.ne.s32.totalorder %s89, %s92
      %p98 = scmp.eq.s32.totalorder %s15, 0
      %p99 = por %p97, %p98
      %p100 = scmp.ne.s32.totalorder %s89, %s92
      %p101 = scmp.eq.s32.totalorder %s20, 1
      %p102 = por %p100, %p101
      %p103 = scmp.ne.s32.totalorder %s92, %s93
      %p104 = scmp.eq.s32.totalorder %s20, 0
      %p105 = por %p103, %p104
      %p106 = scmp.ne.s32.totalorder %s92, %s93
      %p107 = scmp.eq.s32.totalorder %s21, 1
      %p108 = por %p106, %p107
      %p110 = scmp.ne.s32.totalorder %s93, %s109
      %p111 = scmp.eq.s32.totalorder %s21, 0
      %p112 = por %p110, %p111
      %p113 = scmp.le.s32.totalorder 1, %s15
      %p114 = scmp.lt.s32.totalorder %s15, 3
      %p115 = pnand %p113, %p114
      %p116 = pneg %p115
      // Predicated region
      $region9: #{tpu_custom_call.1} parent=5 // pred_check
        _
      $region10: #{tpu_custom_call.1} parent=5 // pred_check_branch
        %118 = sbr.rel (%p115) target = $region12
      $region11: #{tpu_custom_call.1} parent=5 // pred_region
        %s119 = ssub.s32 %s15, 1
        // Predicated region
        $region13: #{tpu_custom_call.1} parent=11 // pred_check
          %p120 = pneg %p79
        $region14: #{tpu_custom_call.1} parent=11 // pred_check_branch
          %122 = sbr.rel (%p120) target = $region16
        $region15: #{tpu_custom_call.1} parent=11 // pred_region
          %s124 = ssub.s32 128, 128
          %125 = vsyncadd [#allocation7], %s124
          %s126 = smul.addr %s25, 128
          %s127 = scalar_lea.hbm %s1, %s126
          %s129 = sshll.u32 [#allocation6], 4
          %s130 = int_to_ptr.vmem [resolvable:$true] %s129
          %132 = dma.hbm_to_vmem [thread:$0]  %s127, 128, %s130, [#allocation7]
        $region16: #{tpu_custom_call.1} parent=11 // pred_fallthru
          _
      $region12: #{tpu_custom_call.1} parent=5 // pred_fallthru
        _
      %p133 = scmp.lt.s32.totalorder %s15, 2
      // Predicated region
      $region17: #{tpu_custom_call.1} parent=5 // pred_check
        %p134 = pneg %p133
      $region18: #{tpu_custom_call.1} parent=5 // pred_check_branch
        %136 = sbr.rel (%p134) target = $region20
      $region19: #{tpu_custom_call.1} parent=5 // pred_region
        // Predicated region
        $region21: #{tpu_custom_call.1} parent=19 // pred_check
          %p137 = pneg %p47
        $region22: #{tpu_custom_call.1} parent=19 // pred_check_branch
          %139 = sbr.rel (%p137) target = $region24
        $region23: #{tpu_custom_call.1} parent=19 // pred_region
          %s140 = sand.u32 %s37, 1
          %s141 = scalar_lea.sflag [#allocation4], %s140
          %s142 = sand.u32 %s37, 1
          %s143 = smul.addr %s142, 2
          %s144 = scalar_lea.vmem [#allocation3], %s143
          %s145 = smul.u32 2, %s22
          %s146 = ssub.s32 3, %s145
          %p147 = scmp.lt.s32.totalorder %s146, 2
          %s148 = scalar_select %p147, %s146, 2
          %s149 = smul.u32 16, %s148
          %s151 = ssub.s32 32, %s149
          %152 = vsyncadd %s141, %s151
          %p153 = scmp.ne.s32.totalorder 0, %s149
          %s154 = smul.addr %s145, 16
          %s155 = scalar_lea.hbm %s0, %s154
          %s156 = sshll.u32 %s148, 4
          %s157 = sshll.u32 %s144, 4
          %s158 = int_to_ptr.vmem [resolvable:$true] %s157
          %160 = dma.hbm_to_vmem [thread:$0]  (%p153), %s155, %s156, %s158, %s141
        $region24: #{tpu_custom_call.1} parent=19 // pred_fallthru
          _
      $region20: #{tpu_custom_call.1} parent=5 // pred_fallthru
        _
      %p161 = scmp.le.s32.totalorder 1, %s15
      %p162 = scmp.lt.s32.totalorder %s15, 3
      %p163 = pnand %p161, %p162
      %p164 = pneg %p163
      // Predicated region
      $region25: #{tpu_custom_call.1} parent=5 // pred_check
        _
      $region26: #{tpu_custom_call.1} parent=5 // pred_check_branch
        %166 = sbr.rel (%p163) target = $region28
      $region27: #{tpu_custom_call.1} parent=5 // pred_region
        %s167 = ssub.s32 %s15, 1
        %s168 = sand.u32 %s40, 1
        %s169 = scalar_lea.sflag [#allocation4], %s168
        %s170 = sand.u32 %s40, 1
        %s171 = smul.addr %s170, 2
        %s172 = scalar_lea.vmem [#allocation3], %s171
        // Predicated region
        $region29: #{tpu_custom_call.1} parent=27 // pred_check
          %p173 = pneg %p53
        $region30: #{tpu_custom_call.1} parent=27 // pred_check_branch
          %175 = sbr.rel (%p173) target = $region32
        $region31: #{tpu_custom_call.1} parent=27 // pred_region
          %176 = dma.done %s169, 32
        $region32: #{tpu_custom_call.1} parent=27 // pred_fallthru
          _
        // Predicated region
        $region33: #{tpu_custom_call.1} parent=27 // pred_check
          %p177 = pneg %p79
        $region34: #{tpu_custom_call.1} parent=27 // pred_check_branch
          %179 = sbr.rel (%p177) target = $region36
        $region35: #{tpu_custom_call.1} parent=27 // pred_region
          %180 = dma.done [#allocation7], 128
        $region36: #{tpu_custom_call.1} parent=27 // pred_fallthru
          _
        %s181 = sand.u32 %s40, 1
        %s182 = scalar_lea.sflag [#allocation4], %s181
        %s183 = sand.u32 %s40, 1
        %s184 = smul.addr %s183, 2
        %s185 = scalar_lea.vmem [#allocation3], %s184
        %p186 = pneg %p53
        %p187 = pneg %p50
        %p188 = pneg %p79
        %p189 = pneg %p76
        %p190 = pneg %p105
        %p191 = pneg %p102
        %s192 = sand.u32 %s92, 1
        %s193 = scalar_lea.sflag [#allocation5], %s192
        %s194 = sand.u32 %s92, 1
        %s195 = smul.addr %s194, 16
        %s196 = scalar_lea.vmem [#allocation8], %s195
        %s197 = smul.u32 2, %s24
        %s198 = ssub.s32 3, %s197
        %p199 = scmp.lt.s32.totalorder %s198, 2
        %s200 = scalar_select %p199, %s198, 2
        %s201 = smul.u32 16, %s200
        %s202 = smul.u32 2, %s24
        %s203 = ssub.s32 3, %s202
        %p204 = scmp.lt.s32.totalorder %s203, 2
        %s205 = scalar_select %p204, %s203, 2
        %s206 = smul.u32 128, %s205
        %p208 = scmp.eq.s32.totalorder %s25, 0
        // Predicated region
        $region37: #{tpu_custom_call.1} parent=27 // pred_check
          %p209 = pneg %p208
        $region38: #{tpu_custom_call.1} parent=27 // pred_check_branch
          %211 = sbr.rel (%p209) target = $region40
        $region39: #{tpu_custom_call.1} parent=27 // pred_region
          %212 = vst [vmem:[#allocation2] sm:$0xff] 0.0
          %213 = vst [vmem:[#allocation2 + $0x8] sm:$0xff] 0.0
        $region40: #{tpu_custom_call.1} parent=27 // pred_fallthru
          _
        %v214 = vlaneseq
        %v215 = vshrl.u32 %v214, 7
        %v216 = vadd.s32 %v215, 8
        %v217 = vadd.s32 %v215, 16
        %v218 = vadd.s32 %v215, 24
        %v219 = vadd.s32 %v215, 32
        %v220 = vadd.s32 %v215, 40
        %v221 = vadd.s32 %v215, 48
        %s222 = smul.u32 %s25, 52
        %v223 = vstv %s222
        %v224 = vadd.s32 %v215, %v223
        %v225 = vadd.s32 %v216, %v223
        %v226 = vadd.s32 %v217, %v223
        %v227 = vadd.s32 %v218, %v223
        %v228 = vadd.s32 %v219, %v223
        %v229 = vadd.s32 %v220, %v223
        %v230 = vadd.s32 %v221, %v223
        %v231 = vld [vmem:[%s172] sm:$0x3]
        %v232 = vlaneseq
        %v233 = vshrl.u32 %v232, 7
        %v234 = vsub.s32 0, %v233
        %v235 = vrot.slane %v231, %v234
        %v236 = vlaneseq
        %v237 = vshrl.u32 %v236, 7
        %v238 = vsub.s32 1, %v237
        %v239 = vrot.slane %v231, %v238
        %vm240 = vcmp.eq.s32.totalorder %v224, %v235
        %vm241 = vcmp.eq.s32.totalorder %v224, %v239
        %vm242 = vcmp.eq.s32.totalorder %v225, %v235
        %vm243 = vcmp.eq.s32.totalorder %v225, %v239
        %vm244 = vcmp.eq.s32.totalorder %v226, %v235
        %vm245 = vcmp.eq.s32.totalorder %v226, %v239
        %vm246 = vcmp.eq.s32.totalorder %v227, %v235
        %vm247 = vcmp.eq.s32.totalorder %v227, %v239
        %vm248 = vcmp.eq.s32.totalorder %v228, %v235
        %vm249 = vcmp.eq.s32.totalorder %v228, %v239
        %vm250 = vcmp.eq.s32.totalorder %v229, %v235
        %vm251 = vcmp.eq.s32.totalorder %v229, %v239
        %vm252 = vcmp.eq.s32.totalorder %v230, %v235
        %vm253 = vcmp.eq.s32.totalorder %v230, %v239
        %v254 = vsel %vm240, 1, 0
        %v255 = vsel %vm241, 1, 0
        %v256 = vsel %vm242, 1, 0
        %v257 = vsel %vm243, 1, 0
        %v258 = vsel %vm244, 1, 0
        %v259 = vsel %vm245, 1, 0
        %v260 = vsel %vm246, 1, 0
        %v261 = vsel %vm247, 1, 0
        %v262 = vsel %vm248, 1, 0
        %v263 = vsel %vm249, 1, 0
        %v264 = vsel %vm250, 1, 0
        %v265 = vsel %vm251, 1, 0
        %v266 = vsel %vm252, 1, 0
        %v267 = vsel %vm253, 1, 0
        %v268 = vcvt.s32.f32 %v254
        %v269 = vcvt.s32.f32 %v255
        %v270 = vcvt.s32.f32 %v256
        %v271 = vcvt.s32.f32 %v257
        %v272 = vcvt.s32.f32 %v258
        %v273 = vcvt.s32.f32 %v259
        %v274 = vcvt.s32.f32 %v260
        %v275 = vcvt.s32.f32 %v261
        %v276 = vcvt.s32.f32 %v262
        %v277 = vcvt.s32.f32 %v263
        %v278 = vcvt.s32.f32 %v264
        %v279 = vcvt.s32.f32 %v265
        %v280 = vcvt.s32.f32 %v266
        %v281 = vcvt.s32.f32 %v267
        %v282 = vpack.c.bf16 %v270, %v268
        %v283 = vpack.c.bf16 %v271, %v269
        %v284 = vpack.c.bf16 %v274, %v272
        %v285 = vpack.c.bf16 %v275, %v273
        %v286 = vpack.c.bf16 %v278, %v276
        %v287 = vpack.c.bf16 %v279, %v277
        %v288 = vpack.c.bf16 %v280, %v280
        %v289 = vpack.c.bf16 %v281, %v281
        %v290 = vld [vmem:[#allocation2] sm:$0xff]
        %v291 = vld [vmem:[#allocation2 + $0x8] sm:$0xff]
        %v292 = vld [vmem:[#allocation6] sm:$0xff]
        %vm293 = vcmask 424960
        %v295 = vsel %vm293, %v292, 0
        %vm297 = vcmask 1041408
        %v299 = vsel %vm297, %v288, 0
        %v302 = vsel %vm297, %v289, 0
        %304 = vmatprep.subr.bf16.mxu0 %v283
        %305 = vmatpush1.bf16.msra.mxu0 %v282
        %306 = vmatprep.subr.bf16.mxu0 %v285
        %307 = vmatpush1.bf16.msra.mxu0 %v284
        %308 = vmatprep.subr.bf16.mxu0 %v287
        %309 = vmatpush1.bf16.msra.mxu0 %v286
        %310 = vmatprep.subr.bf16.mxu0 %v302
        %311 = vmatpush1.bf16.msra.mxu0 %v299
        %312 = vmatprep.subr.bf16.mxu0 0
        %313 = vmatpush1.bf16.msra.mxu0 0
        %314 = vmatprep.subr.bf16.mxu0 0
        %315 = vmatpush1.bf16.msra.mxu0 0
        %316 = vmatprep.subr.bf16.mxu0 0
        %317 = vmatpush1.bf16.msra.mxu0 0
        %318 = vmatprep.subr.bf16.mxu0 0
        %319 = vmatpush1.bf16.msra.mxu0 0
        %320 = vmatprep.subr.bf16.mxu0 0
        %321 = vmatpush1.bf16.msra.mxu0 0
        %322 = vmatprep.subr.bf16.mxu0 0
        %323 = vmatpush1.bf16.msra.mxu0 0
        %324 = vmatprep.subr.bf16.mxu0 0
        %325 = vmatpush1.bf16.msra.mxu0 0
        %326 = vmatprep.subr.bf16.mxu0 0
        %327 = vmatpush1.bf16.msra.mxu0 0
        %328 = vmatprep.subr.bf16.mxu0 0
        %329 = vmatpush1.bf16.msra.mxu0 0
        %330 = vmatprep.subr.bf16.mxu0 0
        %331 = vmatpush1.bf16.msra.mxu0 0
        %332 = vmatprep.subr.bf16.mxu0 0
        %333 = vmatpush1.bf16.msra.mxu0 0
        %334 = vmatprep.subr.bf16.mxu0 0
        %335 = vmatpush1.bf16.msra.mxu0 0
        %336 = vmatprep.mubr.f32.mxu0 0.0
        %337 = vmatmul.mubr.f32.gmra.mrb[0].mxu0 %v295
        %v338 = vpop.f32.mrb[0].mxu0
        %v339 = vadd.f32 0.0, %v338
        %v340 = vpop.f32.mrb[0].mxu0
        %v341 = vadd.f32 0.0, %v340
        %342 = vdwg.mxu0
        %v343 = vadd.f32 %v290, %v339
        %v344 = vadd.f32 %v291, %v341
        %345 = vst [vmem:[#allocation2] sm:$0xff] %v343
        %346 = vst [vmem:[#allocation2 + $0x8] sm:$0xff] %v344
        // Predicated region
        $region41: #{tpu_custom_call.1} parent=27 // pred_check
          %p347 = pneg %p208
        $region42: #{tpu_custom_call.1} parent=27 // pred_check_branch
          %349 = sbr.rel (%p347) target = $region44
        $region43: #{tpu_custom_call.1} parent=27 // pred_region
          %v350 = vld [vmem:[#allocation2] sm:$0xff]
          %v351 = vld [vmem:[#allocation2 + $0x8] sm:$0xff]
          %352 = vst [vmem:[%s196] sm:$0xff] %v350
          %353 = vst [vmem:[%s196 + $0x8] sm:$0xff] %v351
        $region44: #{tpu_custom_call.1} parent=27 // pred_fallthru
          _
        %s354 = sand.u32 %s92, 1
        %s355 = scalar_lea.sflag [#allocation5], %s354
        %s356 = sand.u32 %s92, 1
        %s357 = smul.addr %s356, 16
        %s358 = scalar_lea.vmem [#allocation8], %s357
        // Predicated region
        $region45: #{tpu_custom_call.1} parent=27 // pred_check
          %p359 = pneg %p102
        $region46: #{tpu_custom_call.1} parent=27 // pred_check_branch
          %361 = sbr.rel (%p359) target = $region48
        $region47: #{tpu_custom_call.1} parent=27 // pred_region
          %s362 = smul.u32 2, %s24
          %s363 = ssub.s32 3, %s362
          %p364 = scmp.lt.s32.totalorder %s363, 2
          %s365 = scalar_select %p364, %s363, 2
          %s366 = smul.u32 128, %s365
          %s368 = ssub.s32 256, %s366
          %369 = vsyncadd %s355, %s368
          %p370 = scmp.ne.s32.totalorder 0, %s366
          %s371 = smul.addr %s362, 128
          %s372 = scalar_lea.hbm %s2, %s371
          %s373 = smul.u32 %s365, 8
          %s374 = sshll.u32 %s373, 4
          %s375 = sshll.u32 %s358, 4
          %s376 = int_to_ptr.vmem [resolvable:$true] %s375
          %378 = dma.vmem_to_hbm [thread:$0]  (%p370), %s376, %s374, %s372, %s355
        $region48: #{tpu_custom_call.1} parent=27 // pred_fallthru
          _
      $region28: #{tpu_custom_call.1} parent=5 // pred_fallthru
        _
      %p379 = scmp.le.s32.totalorder 2, %s15
      // Predicated region
      $region49: #{tpu_custom_call.1} parent=5 // pred_check
        %p380 = pneg %p379
      $region50: #{tpu_custom_call.1} parent=5 // pred_check_branch
        %382 = sbr.rel (%p380) target = $region52
      $region51: #{tpu_custom_call.1} parent=5 // pred_region
        %s383 = ssub.s32 %s15, 2
        // Predicated region
        $region53: #{tpu_custom_call.1} parent=51 // pred_check
          %p384 = pneg %p108
        $region54: #{tpu_custom_call.1} parent=51 // pred_check_branch
          %386 = sbr.rel (%p384) target = $region56
        $region55: #{tpu_custom_call.1} parent=51 // pred_region
          %s387 = sand.u32 %s93, 1
          %s388 = scalar_lea.sflag [#allocation5], %s387
          %s389 = sand.u32 %s93, 1
          %s390 = smul.addr %s389, 16
          %s391 = scalar_lea.vmem [#allocation8], %s390
          %392 = dma.done %s388, 256
        $region56: #{tpu_custom_call.1} parent=51 // pred_fallthru
          _
      $region52: #{tpu_custom_call.1} parent=5 // pred_fallthru
        _
    $region6: #{tpu_custom_call.1} parent=1 // loop_footer
      %s19 = sadd.s32 1, %s15
    $region7: #{tpu_custom_call.1} parent=1 // loop_footer_branch
      %14 = sbr.rel target = $region3
    $region8: #{tpu_custom_call.1} parent=1 // loop_exit
      _
    %393 = vsyncpa [#allocation4], 1
    %s394 = scalar_lea.sflag [#allocation4], 1
    %395 = vsyncpa %s394, 1
    %396 = vsyncpa [#allocation7], 1
    %397 = vsyncpa [#allocation5], 1
    %s398 = scalar_lea.sflag [#allocation5], 1
    %399 = vsyncpa %s398, 1

// kernel: tpu_custom_call.1
$region0: #{tpu_custom_call.1}
  #allocation0 [shape = 'u32[]', space=smem, size = 0x4, offset = 0x4, fixed_abs, tag = 'smem constant byte address 0x4 - core index']
  #allocation1 [shape = 'u32[144,128]{1,0:T(1,128)}', space=vmem, size = 0x12000, scoped, tag = 'internal scratch']
  #allocation2 [shape = 'f32[8,256]{1,0:T(8,128)}', space=vmem, size = 0x2000, scoped, tag = 'scratch operand']
  %s0 = inlined_call_operand.hbm [shape: s32[1,289], index: 0, kind: input, shape index: {}]
  %s1 = inlined_call_operand.hbm [shape: f32[8,52], index: 1, kind: input, shape index: {}]
  %s2 = inlined_call_operand.hbm [shape: f32[8,289], index: 2, kind: output, shape index: {}]
  %s3 = sld [smem:[#allocation0]]
  $region57: #{tpu_custom_call.1} parent=0
    _
  %s5 = ssub.s32 1, %s3
  %s6 = scalar_select 0, %s5, %s3
  $region1: #{tpu_custom_call.1} parent=0
    #allocation3 [shape = 'u8[2048]{0}', space=vmem, size = 0x800, scoped, tag = 'input window, operand 0']
    #allocation4 [shape = 's32[2]{0}', space=sflag, size = 0x8, scoped, tag = 'scoped memory for tpu_custom_call.1']
    #allocation5 [shape = 's32[2]{0}', space=sflag, size = 0x8, scoped, tag = 'scoped memory for tpu_custom_call.1']
    #allocation6 [shape = 'u8[4096]{0}', space=vmem, size = 0x1000, scoped, tag = 'input window, operand 1, single buffered']
    #allocation7 [shape = 's32[1]{0}', space=sflag, size = 0x4, scoped, tag = 'scoped memory for tpu_custom_call.1']
    #allocation8 [shape = 'u8[16384]{0}', space=vmem, size = 0x4000, scoped, tag = 'output window, operand 0']
    %7 = vsyncpa [#allocation4], 0
    %s8 = scalar_lea.sflag [#allocation4], 1
    %9 = vsyncpa %s8, 0
    %10 = vsyncpa [#allocation7], 0
    %11 = vsyncpa [#allocation5], 0
    %s12 = scalar_lea.sflag [#allocation5], 1
    %13 = vsyncpa %s12, 0
    loop: start=0, step=1, limit=4
    $region2: #{tpu_custom_call.1} parent=1 // loop_pre_header
      _
    $region3: #{tpu_custom_call.1} parent=1 // loop_header
      %s15 = sphi 0, %s19
      %p16 = scmp.ge.s32.totalorder %s15, 4
      %s22 = sphi 0, %s34
      %s23 = sphi 0, %s30
      %s24 = sphi 0, %s22
      %s25 = sphi 0, %s23
      %s26 = sphi 0, %s24
      %s27 = sphi 0, %s25
      %s37 = sphi 0, %s39
      %s40 = sphi 0, %s37
      %s41 = sphi 0, %s40
      %s57 = sphi 0, %s41
      %s63 = sphi 0, %s65
      %s66 = sphi 0, %s63
      %s67 = sphi 0, %s66
      %s83 = sphi 0, %s67
      %s89 = sphi 0, %s91
      %s92 = sphi 0, %s89
      %s93 = sphi 0, %s92
      %s109 = sphi 0, %s93
    $region4: #{tpu_custom_call.1} parent=1 // loop_header_branch
      %18 = sbr.rel (%p16) target = $region8
    $region5: #{tpu_custom_call.1} parent=1 // loop_body
      %s20 = ssub.s32 %s15, 1
      %s21 = ssub.s32 %s15, 2
      %s28 = sadd.s32 1, %s23
      %p29 = scmp.ge.s32.totalorder %s28, 1
      %s30 = scalar_select %p29, 0, %s28
      %s31 = sadd.s32 1, %s22
      %s32 = scalar_select %p29, %s31, %s22
      %p33 = scmp.ge.s32.totalorder %s32, 2
      %s34 = scalar_select %p33, 0, %s32
      %s35 = ssub.s32 %s22, %s34
      %p36 = scmp.eq.s32.totalorder %s35, 0
      %s38 = sadd.s32 %s37, 1
      %s39 = scalar_select %p36, %s37, %s38
      %p42 = pneg %p36
      %p43 = scmp.eq.s32.totalorder %s15, 1
      %p44 = por %p42, %p43
      %p45 = scmp.ne.s32.totalorder %s37, %s40
      %p46 = scmp.eq.s32.totalorder %s15, 0
      %p47 = por %p45, %p46
      %p48 = scmp.ne.s32.totalorder %s37, %s40
      %p49 = scmp.eq.s32.totalorder %s20, 1
      %p50 = por %p48, %p49
      %p51 = scmp.ne.s32.totalorder %s40, %s41
      %p52 = scmp.eq.s32.totalorder %s20, 0
      %p53 = por %p51, %p52
      %p54 = scmp.ne.s32.totalorder %s40, %s41
      %p55 = scmp.eq.s32.totalorder %s21, 1
      %p56 = por %p54, %p55
      %p58 = scmp.ne.s32.totalorder %s41, %s57
      %p59 = scmp.eq.s32.totalorder %s21, 0
      %p60 = por %p58, %p59
      %s61 = ssub.s32 %s23, %s30
      %p62 = scmp.eq.s32.totalorder %s61, 0
      %s64 = sadd.s32 %s63, 1
      %s65 = scalar_select %p62, %s63, %s64
      %p68 = pneg %p62
      %p69 = scmp.eq.s32.totalorder %s15, 1
      %p70 = por %p68, %p69
      %p71 = scmp.ne.s32.totalorder %s63, %s66
      %p72 = scmp.eq.s32.totalorder %s15, 0
      %p73 = por %p71, %p72
      %p74 = scmp.ne.s32.totalorder %s63, %s66
      %p75 = scmp.eq.s32.totalorder %s20, 1
      %p76 = por %p74, %p75
      %p77 = scmp.ne.s32.totalorder %s66, %s67
      %p78 = scmp.eq.s32.totalorder %s20, 0
      %p79 = por %p77, %p78
      %p80 = scmp.ne.s32.totalorder %s66, %s67
      %p81 = scmp.eq.s32.totalorder %s21, 1
      %p82 = por %p80, %p81
      %p84 = scmp.ne.s32.totalorder %s67, %s83
      %p85 = scmp.eq.s32.totalorder %s21, 0
      %p86 = por %p84, %p85
      %s87 = ssub.s32 %s22, %s34
      %p88 = scmp.eq.s32.totalorder %s87, 0
      %s90 = sadd.s32 %s89, 1
      %s91 = scalar_select %p88, %s89, %s90
      %p94 = pneg %p88
      %p95 = scmp.eq.s32.totalorder %s15, 1
      %p96 = por %p94, %p95
      %p97 = scmp.ne.s32.totalorder %s89, %s92
      %p98 = scmp.eq.s32.totalorder %s15, 0
      %p99 = por %p97, %p98
      %p100 = scmp.ne.s32.totalorder %s89, %s92
      %p101 = scmp.eq.s32.totalorder %s20, 1
      %p102 = por %p100, %p101
      %p103 = scmp.ne.s32.totalorder %s92, %s93
      %p104 = scmp.eq.s32.totalorder %s20, 0
      %p105 = por %p103, %p104
      %p106 = scmp.ne.s32.totalorder %s92, %s93
      %p107 = scmp.eq.s32.totalorder %s21, 1
      %p108 = por %p106, %p107
      %p110 = scmp.ne.s32.totalorder %s93, %s109
      %p111 = scmp.eq.s32.totalorder %s21, 0
      %p112 = por %p110, %p111
      %p113 = scmp.le.s32.totalorder 1, %s15
      %p114 = scmp.lt.s32.totalorder %s15, 3
      %p115 = pnand %p113, %p114
      %p116 = pneg %p115
      // Predicated region
      $region9: #{tpu_custom_call.1} parent=5 // pred_check
        _
      $region10: #{tpu_custom_call.1} parent=5 // pred_check_branch
        %118 = sbr.rel (%p115) target = $region12
      $region11: #{tpu_custom_call.1} parent=5 // pred_region
        %s119 = ssub.s32 %s15, 1
        // Predicated region
        $region13: #{tpu_custom_call.1} parent=11 // pred_check
          %p120 = pneg %p79
        $region14: #{tpu_custom_call.1} parent=11 // pred_check_branch
          %122 = sbr.rel (%p120) target = $region16
        $region15: #{tpu_custom_call.1} parent=11 // pred_region
          %s124 = ssub.s32 128, 128
          %125 = vsyncadd [#allocation7], %s124
          %s126 = smul.addr %s25, 128
          %s127 = scalar_lea.hbm %s1, %s126
          %s129 = sshll.u32 [#allocation6], 4
          %s130 = int_to_ptr.vmem [resolvable:$true] %s129
          %132 = dma.hbm_to_vmem [thread:$0]  %s127, 128, %s130, [#allocation7]
        $region16: #{tpu_custom_call.1} parent=11 // pred_fallthru
          _
      $region12: #{tpu_custom_call.1} parent=5 // pred_fallthru
        _
      %p133 = scmp.lt.s32.totalorder %s15, 2
      // Predicated region
      $region17: #{tpu_custom_call.1} parent=5 // pred_check
        %p134 = pneg %p133
      $region18: #{tpu_custom_call.1} parent=5 // pred_check_branch
        %136 = sbr.rel (%p134) target = $region20
      $region19: #{tpu_custom_call.1} parent=5 // pred_region
        // Predicated region
        $region21: #{tpu_custom_call.1} parent=19 // pred_check
          %p137 = pneg %p47
        $region22: #{tpu_custom_call.1} parent=19 // pred_check_branch
          %139 = sbr.rel (%p137) target = $region24
        $region23: #{tpu_custom_call.1} parent=19 // pred_region
          %s140 = sand.u32 %s37, 1
          %s141 = scalar_lea.sflag [#allocation4], %s140
          %s142 = sand.u32 %s37, 1
          %s143 = smul.addr %s142, 2
          %s144 = scalar_lea.vmem [#allocation3], %s143
          %s145 = smul.u32 2, %s22
          %s146 = ssub.s32 3, %s145
          %p147 = scmp.lt.s32.totalorder %s146, 2
          %s148 = scalar_select %p147, %s146, 2
          %s149 = smul.u32 16, %s148
          %s151 = ssub.s32 32, %s149
          %152 = vsyncadd %s141, %s151
          %p153 = scmp.ne.s32.totalorder 0, %s149
          %s154 = smul.addr %s145, 16
          %s155 = scalar_lea.hbm %s0, %s154
          %s156 = sshll.u32 %s148, 4
          %s157 = sshll.u32 %s144, 4
          %s158 = int_to_ptr.vmem [resolvable:$true] %s157
          %160 = dma.hbm_to_vmem [thread:$0]  (%p153), %s155, %s156, %s158, %s141
        $region24: #{tpu_custom_call.1} parent=19 // pred_fallthru
          _
      $region20: #{tpu_custom_call.1} parent=5 // pred_fallthru
        _
      %p161 = scmp.le.s32.totalorder 1, %s15
      %p162 = scmp.lt.s32.totalorder %s15, 3
      %p163 = pnand %p161, %p162
      %p164 = pneg %p163
      // Predicated region
      $region25: #{tpu_custom_call.1} parent=5 // pred_check
        _
      $region26: #{tpu_custom_call.1} parent=5 // pred_check_branch
        %166 = sbr.rel (%p163) target = $region28
      $region27: #{tpu_custom_call.1} parent=5 // pred_region
        %s167 = ssub.s32 %s15, 1
        %s168 = sand.u32 %s40, 1
        %s169 = scalar_lea.sflag [#allocation4], %s168
        %s170 = sand.u32 %s40, 1
        %s171 = smul.addr %s170, 2
        %s172 = scalar_lea.vmem [#allocation3], %s171
        // Predicated region
        $region29: #{tpu_custom_call.1} parent=27 // pred_check
          %p173 = pneg %p53
        $region30: #{tpu_custom_call.1} parent=27 // pred_check_branch
          %175 = sbr.rel (%p173) target = $region32
        $region31: #{tpu_custom_call.1} parent=27 // pred_region
          %176 = dma.done %s169, 32
        $region32: #{tpu_custom_call.1} parent=27 // pred_fallthru
          _
        // Predicated region
        $region33: #{tpu_custom_call.1} parent=27 // pred_check
          %p177 = pneg %p79
        $region34: #{tpu_custom_call.1} parent=27 // pred_check_branch
          %179 = sbr.rel (%p177) target = $region36
        $region35: #{tpu_custom_call.1} parent=27 // pred_region
          %180 = dma.done [#allocation7], 128
        $region36: #{tpu_custom_call.1} parent=27 // pred_fallthru
          _
        %s181 = sand.u32 %s40, 1
        %s182 = scalar_lea.sflag [#allocation4], %s181
        %s183 = sand.u32 %s40, 1
        %s184 = smul.addr %s183, 2
        %s185 = scalar_lea.vmem [#allocation3], %s184
        %p186 = pneg %p53
        %p187 = pneg %p50
        %p188 = pneg %p79
        %p189 = pneg %p76
        %p190 = pneg %p105
        %p191 = pneg %p102
        %s192 = sand.u32 %s92, 1
        %s193 = scalar_lea.sflag [#allocation5], %s192
        %s194 = sand.u32 %s92, 1
        %s195 = smul.addr %s194, 16
        %s196 = scalar_lea.vmem [#allocation8], %s195
        %s197 = smul.u32 2, %s24
        %s198 = ssub.s32 3, %s197
        %p199 = scmp.lt.s32.totalorder %s198, 2
        %s200 = scalar_select %p199, %s198, 2
        %s201 = smul.u32 16, %s200
        %s202 = smul.u32 2, %s24
        %s203 = ssub.s32 3, %s202
        %p204 = scmp.lt.s32.totalorder %s203, 2
        %s205 = scalar_select %p204, %s203, 2
        %s206 = smul.u32 128, %s205
        %p207 = scmp.eq.s32.totalorder %s25, 0
        // Predicated region
        $region37: #{tpu_custom_call.1} parent=27 // pred_check
          %p208 = pneg %p207
        $region38: #{tpu_custom_call.1} parent=27 // pred_check_branch
          %210 = sbr.rel (%p208) target = $region40
        $region39: #{tpu_custom_call.1} parent=27 // pred_region
          %211 = vst [vmem:[#allocation2] sm:$0xff] 0.0
          %212 = vst [vmem:[#allocation2 + $0x8] sm:$0xff] 0.0
        $region40: #{tpu_custom_call.1} parent=27 // pred_fallthru
          _
        %v213 = vlaneseq
        %v214 = vshrl.u32 %v213, 7
        %v215 = vadd.s32 %v214, 8
        %v216 = vadd.s32 %v214, 16
        %v217 = vadd.s32 %v214, 24
        %v218 = vadd.s32 %v214, 32
        %v219 = vadd.s32 %v214, 40
        %v220 = vadd.s32 %v214, 48
        %s221 = smul.u32 %s25, 52
        %v222 = vstv %s221
        %v223 = vadd.s32 %v214, %v222
        %v224 = vadd.s32 %v215, %v222
        %v225 = vadd.s32 %v216, %v222
        %v226 = vadd.s32 %v217, %v222
        %v227 = vadd.s32 %v218, %v222
        %v228 = vadd.s32 %v219, %v222
        %v229 = vadd.s32 %v220, %v222
        %v230 = vld [vmem:[%s172] sm:$0x3]
        %v231 = vlaneseq
        %v232 = vshrl.u32 %v231, 7
        %v233 = vsub.s32 0, %v232
        %v234 = vrot.slane %v230, %v233
        %v235 = vlaneseq
        %v236 = vshrl.u32 %v235, 7
        %v237 = vsub.s32 1, %v236
        %v238 = vrot.slane %v230, %v237
        %vm239 = vcmp.eq.s32.totalorder %v223, %v234
        %vm240 = vcmp.eq.s32.totalorder %v223, %v238
        %vm241 = vcmp.eq.s32.totalorder %v224, %v234
        %vm242 = vcmp.eq.s32.totalorder %v224, %v238
        %vm243 = vcmp.eq.s32.totalorder %v225, %v234
        %vm244 = vcmp.eq.s32.totalorder %v225, %v238
        %vm245 = vcmp.eq.s32.totalorder %v226, %v234
        %vm246 = vcmp.eq.s32.totalorder %v226, %v238
        %vm247 = vcmp.eq.s32.totalorder %v227, %v234
        %vm248 = vcmp.eq.s32.totalorder %v227, %v238
        %vm249 = vcmp.eq.s32.totalorder %v228, %v234
        %vm250 = vcmp.eq.s32.totalorder %v228, %v238
        %vm251 = vcmp.eq.s32.totalorder %v229, %v234
        %vm252 = vcmp.eq.s32.totalorder %v229, %v238
        %v253 = vsel %vm239, 1, 0
        %v254 = vsel %vm240, 1, 0
        %v255 = vsel %vm241, 1, 0
        %v256 = vsel %vm242, 1, 0
        %v257 = vsel %vm243, 1, 0
        %v258 = vsel %vm244, 1, 0
        %v259 = vsel %vm245, 1, 0
        %v260 = vsel %vm246, 1, 0
        %v261 = vsel %vm247, 1, 0
        %v262 = vsel %vm248, 1, 0
        %v263 = vsel %vm249, 1, 0
        %v264 = vsel %vm250, 1, 0
        %v265 = vsel %vm251, 1, 0
        %v266 = vsel %vm252, 1, 0
        %v267 = vcvt.s32.f32 %v253
        %v268 = vcvt.s32.f32 %v254
        %v269 = vcvt.s32.f32 %v255
        %v270 = vcvt.s32.f32 %v256
        %v271 = vcvt.s32.f32 %v257
        %v272 = vcvt.s32.f32 %v258
        %v273 = vcvt.s32.f32 %v259
        %v274 = vcvt.s32.f32 %v260
        %v275 = vcvt.s32.f32 %v261
        %v276 = vcvt.s32.f32 %v262
        %v277 = vcvt.s32.f32 %v263
        %v278 = vcvt.s32.f32 %v264
        %v279 = vcvt.s32.f32 %v265
        %v280 = vcvt.s32.f32 %v266
        %v281 = vld [vmem:[#allocation2] sm:$0xff]
        %v282 = vld [vmem:[#allocation2 + $0x8] sm:$0xff]
        %v283 = vld [vmem:[#allocation6] sm:$0xff]
        %vm284 = vcmask 424960
        %v286 = vsel %vm284, %v283, 0
        %vm288 = vcmask 1043456
        %v290 = vsel %vm288, %v279, 0
        %v293 = vsel %vm288, %v280, 0
        %295 = vmatprep.subr.mxu0 %v268
        %296 = vmatpush1.msra.mxu0 %v267
        %297 = vmatprep.subr.mxu0 %v270
        %298 = vmatpush1.msra.mxu0 %v269
        %299 = vmatprep.subr.mxu0 %v272
        %300 = vmatpush1.msra.mxu0 %v271
        %301 = vmatprep.subr.mxu0 %v274
        %302 = vmatpush1.msra.mxu0 %v273
        %303 = vmatprep.subr.mxu0 %v276
        %304 = vmatpush1.msra.mxu0 %v275
        %305 = vmatprep.subr.mxu0 %v278
        %306 = vmatpush1.msra.mxu0 %v277
        %307 = vmatprep.subr.mxu0 %v293
        %308 = vmatpush1.msra.mxu0 %v290
        %309 = vmatprep.subr.mxu0 0.0
        %310 = vmatpush1.msra.mxu0 0.0
        %311 = vmatprep.subr.mxu0 0.0
        %312 = vmatpush1.msra.mxu0 0.0
        %313 = vmatprep.subr.mxu0 0.0
        %314 = vmatpush1.msra.mxu0 0.0
        %315 = vmatprep.subr.mxu0 0.0
        %316 = vmatpush1.msra.mxu0 0.0
        %317 = vmatprep.subr.mxu0 0.0
        %318 = vmatpush1.msra.mxu0 0.0
        %319 = vmatprep.subr.mxu0 0.0
        %320 = vmatpush1.msra.mxu0 0.0
        %321 = vmatprep.subr.mxu0 0.0
        %322 = vmatpush1.msra.mxu0 0.0
        %323 = vmatprep.subr.mxu0 0.0
        %324 = vmatpush1.msra.mxu0 0.0
        %325 = vmatprep.subr.mxu0 0.0
        %326 = vmatpush1.msra.mxu0 0.0
        %327 = vmatprep.subr.mxu0 0.0
        %328 = vmatpush1.msra.mxu0 0.0
        %329 = vmatprep.subr.mxu0 0.0
        %330 = vmatpush1.msra.mxu0 0.0
        %331 = vmatprep.subr.mxu0 0.0
        %332 = vmatpush1.msra.mxu0 0.0
        %333 = vmatprep.subr.mxu0 0.0
        %334 = vmatpush1.msra.mxu0 0.0
        %335 = vmatprep.subr.mxu0 0.0
        %336 = vmatpush1.msra.mxu0 0.0
        %337 = vmatprep.subr.mxu0 0.0
        %338 = vmatpush1.msra.mxu0 0.0
        %339 = vmatprep.subr.mxu0 0.0
        %340 = vmatpush1.msra.mxu0 0.0
        %341 = vmatprep.subr.mxu0 0.0
        %342 = vmatpush1.msra.mxu0 0.0
        %343 = vmatprep.subr.mxu0 0.0
        %344 = vmatpush1.msra.mxu0 0.0
        %345 = vmatprep.subr.mxu0 0.0
        %346 = vmatpush1.msra.mxu0 0.0
        %347 = vmatprep.subr.mxu0 0.0
        %348 = vmatpush1.msra.mxu0 0.0
        %349 = vmatprep.subr.mxu0 0.0
        %350 = vmatpush1.msra.mxu0 0.0
        %351 = vmatprep.subr.mxu0 0.0
        %352 = vmatpush1.msra.mxu0 0.0
        %353 = vmatprep.subr.mxu0 0.0
        %354 = vmatpush1.msra.mxu0 0.0
        %355 = vmatprep.subr.mxu0 0.0
        %356 = vmatpush1.msra.mxu0 0.0
        %357 = vmatprep.subr.mxu0 0.0
        %358 = vmatpush1.msra.mxu0 0.0
        %359 = vmatprep.mubr.f32.mxu0 0.0
        %360 = vmatmul.mubr.f32.gmra.mrb[0].mxu0 %v286
        %v361 = vpop.f32.mrb[0].mxu0
        %v362 = vadd.f32 0.0, %v361
        %v363 = vpop.f32.mrb[0].mxu0
        %v364 = vadd.f32 0.0, %v363
        %365 = vdwg.mxu0
        %v366 = vadd.f32 %v281, %v362
        %v367 = vadd.f32 %v282, %v364
        %368 = vst [vmem:[#allocation2] sm:$0xff] %v366
        %369 = vst [vmem:[#allocation2 + $0x8] sm:$0xff] %v367
        // Predicated region
        $region41: #{tpu_custom_call.1} parent=27 // pred_check
          %p370 = pneg %p207
        $region42: #{tpu_custom_call.1} parent=27 // pred_check_branch
          %372 = sbr.rel (%p370) target = $region44
        $region43: #{tpu_custom_call.1} parent=27 // pred_region
          %v373 = vld [vmem:[#allocation2] sm:$0xff]
          %v374 = vld [vmem:[#allocation2 + $0x8] sm:$0xff]
          %375 = vst [vmem:[%s196] sm:$0xff] %v373
          %376 = vst [vmem:[%s196 + $0x8] sm:$0xff] %v374
        $region44: #{tpu_custom_call.1} parent=27 // pred_fallthru
          _
        %s377 = sand.u32 %s92, 1
        %s378 = scalar_lea.sflag [#allocation5], %s377
        %s379 = sand.u32 %s92, 1
        %s380 = smul.addr %s379, 16
        %s381 = scalar_lea.vmem [#allocation8], %s380
        // Predicated region
        $region45: #{tpu_custom_call.1} parent=27 // pred_check
          %p382 = pneg %p102
        $region46: #{tpu_custom_call.1} parent=27 // pred_check_branch
          %384 = sbr.rel (%p382) target = $region48
        $region47: #{tpu_custom_call.1} parent=27 // pred_region
          %s385 = smul.u32 2, %s24
          %s386 = ssub.s32 3, %s385
          %p387 = scmp.lt.s32.totalorder %s386, 2
          %s388 = scalar_select %p387, %s386, 2
          %s389 = smul.u32 128, %s388
          %s391 = ssub.s32 256, %s389
          %392 = vsyncadd %s378, %s391
          %p393 = scmp.ne.s32.totalorder 0, %s389
          %s394 = smul.addr %s385, 128
          %s395 = scalar_lea.hbm %s2, %s394
          %s396 = smul.u32 %s388, 8
          %s397 = sshll.u32 %s396, 4
          %s398 = sshll.u32 %s381, 4
          %s399 = int_to_ptr.vmem [resolvable:$true] %s398
          %401 = dma.vmem_to_hbm [thread:$0]  (%p393), %s399, %s397, %s395, %s378
        $region48: #{tpu_custom_call.1} parent=27 // pred_fallthru
          _
      $region28: #{tpu_custom_call.1} parent=5 // pred_fallthru
        _
      %p402 = scmp.le.s32.totalorder 2, %s15
      // Predicated region
      $region49: #{tpu_custom_call.1} parent=5 // pred_check
        %p403 = pneg %p402
      $region50: #{tpu_custom_call.1} parent=5 // pred_check_branch
        %405 = sbr.rel (%p403) target = $region52
      $region51: #{tpu_custom_call.1} parent=5 // pred_region
        %s406 = ssub.s32 %s15, 2
        // Predicated region
        $region53: #{tpu_custom_call.1} parent=51 // pred_check
          %p407 = pneg %p108
        $region54: #{tpu_custom_call.1} parent=51 // pred_check_branch
          %409 = sbr.rel (%p407) target = $region56
        $region55: #{tpu_custom_call.1} parent=51 // pred_region
          %s410 = sand.u32 %s93, 1
          %s411 = scalar_lea.sflag [#allocation5], %s410
          %s412 = sand.u32 %s93, 1
          %s413 = smul.addr %s412, 16
          %s414 = scalar_lea.vmem [#allocation8], %s413
          %415 = dma.done %s411, 256
        $region56: #{tpu_custom_call.1} parent=51 // pred_fallthru
          _
      $region52: #{tpu_custom_call.1} parent=5 // pred_fallthru
        _
    $region6: #{tpu_custom_call.1} parent=1 // loop_footer
      %s19 = sadd.s32 1, %s15
    $region7: #{tpu_custom_call.1} parent=1 // loop_footer_branch
      %14 = sbr.rel target = $region3
    $region8: #{tpu_custom_call.1} parent=1 // loop_exit
      _
    %416 = vsyncpa [#allocation4], 1
    %s417 = scalar_lea.sflag [#allocation4], 1
    %418 = vsyncpa %s417, 1
    %419 = vsyncpa [#allocation7], 1
    %420 = vsyncpa [#allocation5], 1
    %s421 = scalar_lea.sflag [#allocation5], 1
    %422 = vsyncpa %s421, 1

</llo_original>
